<compile_context>
chip_gen: v7x
topology: tpu7x:2x2x1
jax: 0.10.0
libtpu: 0.0.40
codegen_flags: <defaults>
</compile_context>

<pallas_src>
import jax
import jax.numpy as jnp
from jax.experimental import pallas as pl
from jax.experimental.pallas import tpu as pltpu

_LANES = 128       # vreg lane width
_ROW_TILE = 2048   # rows of 128 lanes per block -> 3 MiB per (1, 3, TR, 128) f32 block


def _rgb_to_ycbcr_kernel(s_ref, x_ref, o_ref):
    # s_ref: SMEM (5,) f32 = [wr, wg, wb, cb_scale, cr_scale]
    # x_ref / o_ref: VMEM (1, 3, TR, 128)
    wr = s_ref[0]
    wg = s_ref[1]
    wb = s_ref[2]
    cb_scale = s_ref[3]
    cr_scale = s_ref[4]

    r = x_ref[0, 0, :, :]
    g = x_ref[0, 1, :, :]
    b = x_ref[0, 2, :, :]

    y = wr * r + wg * g + wb * b
    o_ref[0, 0, :, :] = y.astype(o_ref.dtype)
    o_ref[0, 1, :, :] = ((b - y) * cb_scale + 0.5).astype(o_ref.dtype)
    o_ref[0, 2, :, :] = ((r - y) * cr_scale + 0.5).astype(o_ref.dtype)


def rgb_to_ycbcr(image: jax.Array, w: jax.Array) -> jax.Array:
    """Convert a (B, 3, H, W) RGB image (range (0, 1)) to YCbCr. w = (wr, wg, wb)."""
    if image.ndim != 4 or image.shape[1] != 3:
        raise ValueError(f"Input must have shape (B, 3, H, W). Got {image.shape}")
    B, C, H, W = image.shape
    N = H * W

    w = jnp.asarray(w, dtype=jnp.float32).reshape(3)
    wr, wg, wb = w[0], w[1], w[2]
    scalars = jnp.stack(
        [wr, wg, wb, 0.5 / (1.0 - wb), 0.5 / (1.0 - wr)]
    ).astype(jnp.float32)

    # Flatten spatial dims and make the last axis lane-dense (multiple of 128).
    x = image.reshape(B, C, N)
    pad = (-N) % _LANES
    if pad:
        x = jnp.pad(x, ((0, 0), (0, 0), (0, pad)))
    n_pad = N + pad
    rows = n_pad // _LANES
    x = x.reshape(B, C, rows, _LANES)

    row_tile = min(rows, _ROW_TILE)
    grid_r = pl.cdiv(rows, row_tile)

    out = pl.pallas_call(
        _rgb_to_ycbcr_kernel,
        out_shape=jax.ShapeDtypeStruct((B, C, rows, _LANES), image.dtype),
        grid_spec=pl.GridSpec(
            grid=(B, grid_r),
            in_specs=[
                pl.BlockSpec(memory_space=pltpu.SMEM),  # 5 scalar weights/scales
                pl.BlockSpec((1, C, row_tile, _LANES), lambda b, r: (b, 0, r, 0)),
            ],
            out_specs=pl.BlockSpec((1, C, row_tile, _LANES), lambda b, r: (b, 0, r, 0)),
        ),
        compiler_params=pltpu.CompilerParams(
            dimension_semantics=("parallel", "parallel"),
        ),
    )(scalars, x)

    out = out.reshape(B, C, n_pad)
    if pad:
        out = out[:, :, :N]
    return out.reshape(B, C, H, W)


class RgbToYcbcr:
    """JAX/Pallas equivalent of the PyTorch RgbToYcbcr module."""

    def __init__(self, w):
        self.w = jnp.asarray(w, dtype=jnp.float32)

    def __call__(self, image: jax.Array) -> jax.Array:
        return rgb_to_ycbcr(image, self.w)


def _reference(image, w):
    # pure-JAX reference for correctness check
    wr, wg, wb = w[0], w[1], w[2]
    r = image[..., 0, :, :]
    g = image[..., 1, :, :]
    b = image[..., 2, :, :]
    y = wr * r + wg * g + wb * b
    cb = (b - y) * (0.5 / (1.0 - wb)) + 0.5
    cr = (r - y) * (0.5 / (1.0 - wr)) + 0.5
    return jnp.stack([y, cb, cr], axis=-3)


if __name__ == "__main__":
    key = jax.random.PRNGKey(0)
    w_human = jnp.array([0.299, 0.587, 0.114], dtype=jnp.float32)
    module = RgbToYcbcr(w_human)

    # Main check: lane-dense path (H*W is a multiple of 128).
    B, C, H, W = 2, 3, 16, 16
    image = jax.random.uniform(key, (B, C, H, W), dtype=jnp.float32)
    out = jax.block_until_ready(module(image))
    ref = _reference(image, w_human)
    assert out.shape == (B, C, H, W)
    assert jnp.allclose(out, ref, atol=1e-5, rtol=1e-5)

    # Secondary check: ragged spatial size (H*W not a multiple of 128 -> pad path).
    key2 = jax.random.PRNGKey(1)
    image2 = jax.random.uniform(key2, (2, 3, 4, 5), dtype=jnp.float32)
    out2 = jax.block_until_ready(module(image2))
    ref2 = _reference(image2, w_human)
    assert out2.shape == (2, 3, 4, 5)
    assert jnp.allclose(out2, ref2, atol=1e-5, rtol=1e-5)

    print("KERNEL_OK")
</pallas_src>

<mosaic_0001>
module attributes {stable_mosaic.version = 11 : i64} {
  func.func @_rgb_to_ycbcr_kernel(%arg0: i32, %arg1: i32, %arg2: memref<5xf32, #tpu.memory_space<smem>>, %arg3: memref<1x3x2x128xf32, #tpu.memory_space<vmem>>, %arg4: memref<1x3x2x128xf32, #tpu.memory_space<vmem>>) attributes {dimension_semantics = [#tpu.dimension_semantics<parallel>, #tpu.dimension_semantics<parallel>], iteration_bounds = array<i64: 2, 1>, scalar_prefetch = 0 : i64, scratch_operands = 0 : i64, tpu.core_type = #tpu.core_type<tc>, window_params = [{transform_indices = @transform_0, window_bounds = array<i64: 5>}, {transform_indices = @transform_1, window_bounds = array<i64: 1, 3, 2, 128>}, {transform_indices = @transform_2, window_bounds = array<i64: 1, 3, 2, 128>}]} {
    %c0 = arith.constant 0 : index
    %0 = memref.load %arg2[%c0] : memref<5xf32, #tpu.memory_space<smem>>
    %c1 = arith.constant 1 : index
    %1 = memref.load %arg2[%c1] : memref<5xf32, #tpu.memory_space<smem>>
    %c2 = arith.constant 2 : index
    %2 = memref.load %arg2[%c2] : memref<5xf32, #tpu.memory_space<smem>>
    %c3 = arith.constant 3 : index
    %3 = memref.load %arg2[%c3] : memref<5xf32, #tpu.memory_space<smem>>
    %c4 = arith.constant 4 : index
    %4 = memref.load %arg2[%c4] : memref<5xf32, #tpu.memory_space<smem>>
    %c0_0 = arith.constant 0 : index
    %c0_1 = arith.constant 0 : index
    %c0_2 = arith.constant 0 : index
    %c0_3 = arith.constant 0 : index
    %5 = vector.load %arg3[%c0_0, %c0_1, %c0_2, %c0_3] : memref<1x3x2x128xf32, #tpu.memory_space<vmem>>, vector<1x1x2x128xf32>
    %6 = vector.shape_cast %5 : vector<1x1x2x128xf32> to vector<2x128xf32>
    %c0_4 = arith.constant 0 : index
    %c1_5 = arith.constant 1 : index
    %c0_6 = arith.constant 0 : index
    %c0_7 = arith.constant 0 : index
    %7 = vector.load %arg3[%c0_4, %c1_5, %c0_6, %c0_7] : memref<1x3x2x128xf32, #tpu.memory_space<vmem>>, vector<1x1x2x128xf32>
    %8 = vector.shape_cast %7 : vector<1x1x2x128xf32> to vector<2x128xf32>
    %c0_8 = arith.constant 0 : index
    %c2_9 = arith.constant 2 : index
    %c0_10 = arith.constant 0 : index
    %c0_11 = arith.constant 0 : index
    %9 = vector.load %arg3[%c0_8, %c2_9, %c0_10, %c0_11] : memref<1x3x2x128xf32, #tpu.memory_space<vmem>>, vector<1x1x2x128xf32>
    %10 = vector.shape_cast %9 : vector<1x1x2x128xf32> to vector<2x128xf32>
    %11 = vector.broadcast %0 : f32 to vector<2x128xf32>
    %12 = arith.mulf %11, %6 : vector<2x128xf32>
    %13 = vector.broadcast %1 : f32 to vector<2x128xf32>
    %14 = arith.mulf %13, %8 : vector<2x128xf32>
    %15 = arith.addf %12, %14 : vector<2x128xf32>
    %16 = vector.broadcast %2 : f32 to vector<2x128xf32>
    %17 = arith.mulf %16, %10 : vector<2x128xf32>
    %18 = arith.addf %15, %17 : vector<2x128xf32>
    %c0_12 = arith.constant 0 : index
    %c0_13 = arith.constant 0 : index
    %c0_14 = arith.constant 0 : index
    %c0_15 = arith.constant 0 : index
    %19 = vector.load %arg4[%c0_12, %c0_13, %c0_14, %c0_15] : memref<1x3x2x128xf32, #tpu.memory_space<vmem>>, vector<1x1x2x128xf32>
    %20 = vector.shape_cast %19 : vector<1x1x2x128xf32> to vector<2x128xf32>
    %21 = vector.shape_cast %18 : vector<2x128xf32> to vector<1x1x2x128xf32>
    tpu.vector_store %arg4[%c0_12, %c0_13, %c0_14, %c0_15], %21 {strides = array<i32>} : memref<1x3x2x128xf32, #tpu.memory_space<vmem>>, vector<1x1x2x128xf32>,
    %22 = arith.subf %10, %18 : vector<2x128xf32>
    %23 = vector.broadcast %3 : f32 to vector<2x128xf32>
    %24 = arith.mulf %22, %23 : vector<2x128xf32>
    %cst = arith.constant 5.000000e-01 : f32
    %25 = vector.broadcast %cst : f32 to vector<2x128xf32>
    %26 = arith.addf %24, %25 : vector<2x128xf32>
    %c0_16 = arith.constant 0 : index
    %c1_17 = arith.constant 1 : index
    %c0_18 = arith.constant 0 : index
    %c0_19 = arith.constant 0 : index
    %27 = vector.load %arg4[%c0_16, %c1_17, %c0_18, %c0_19] : memref<1x3x2x128xf32, #tpu.memory_space<vmem>>, vector<1x1x2x128xf32>
    %28 = vector.shape_cast %27 : vector<1x1x2x128xf32> to vector<2x128xf32>
    %29 = vector.shape_cast %26 : vector<2x128xf32> to vector<1x1x2x128xf32>
    tpu.vector_store %arg4[%c0_16, %c1_17, %c0_18, %c0_19], %29 {strides = array<i32>} : memref<1x3x2x128xf32, #tpu.memory_space<vmem>>, vector<1x1x2x128xf32>,
    %30 = arith.subf %6, %18 : vector<2x128xf32>
    %31 = vector.broadcast %4 : f32 to vector<2x128xf32>
    %32 = arith.mulf %30, %31 : vector<2x128xf32>
    %cst_20 = arith.constant 5.000000e-01 : f32
    %33 = vector.broadcast %cst_20 : f32 to vector<2x128xf32>
    %34 = arith.addf %32, %33 : vector<2x128xf32>
    %c0_21 = arith.constant 0 : index
    %c2_22 = arith.constant 2 : index
    %c0_23 = arith.constant 0 : index
    %c0_24 = arith.constant 0 : index
    %35 = vector.load %arg4[%c0_21, %c2_22, %c0_23, %c0_24] : memref<1x3x2x128xf32, #tpu.memory_space<vmem>>, vector<1x1x2x128xf32>
    %36 = vector.shape_cast %35 : vector<1x1x2x128xf32> to vector<2x128xf32>
    %37 = vector.shape_cast %34 : vector<2x128xf32> to vector<1x1x2x128xf32>
    tpu.vector_store %arg4[%c0_21, %c2_22, %c0_23, %c0_24], %37 {strides = array<i32>} : memref<1x3x2x128xf32, #tpu.memory_space<vmem>>, vector<1x1x2x128xf32>,
    return
  }
  func.func @transform_0(%arg0: i32, %arg1: i32) -> i32 {
    %c0_i32 = arith.constant 0 : i32
    %c0_i32_0 = arith.constant 0 : i32
    return %c0_i32 : i32
  }
  func.func @transform_1(%arg0: i32, %arg1: i32) -> (i32, i32, i32, i32) {
    %c0_i32 = arith.constant 0 : i32
    %c0_i32_0 = arith.constant 0 : i32
    %c0_i32_1 = arith.constant 0 : i32
    return %arg0, %c0_i32, %arg1, %c0_i32_0 : i32, i32, i32, i32
  }
  func.func @transform_2(%arg0: i32, %arg1: i32) -> (i32, i32, i32, i32) {
    %c0_i32 = arith.constant 0 : i32
    %c0_i32_0 = arith.constant 0 : i32
    %c0_i32_1 = arith.constant 0 : i32
    return %arg0, %c0_i32, %arg1, %c0_i32_0 : i32, i32, i32, i32
  }
}

</mosaic_0001>

<llo_original>
// kernel: tpu_custom_call.1
$region0: #{tpu_custom_call.1}
  #allocation0 [shape = 'u32[]', space=smem, size = 0x4, offset = 0x4, fixed_abs, tag = 'smem constant byte address 0x4 - core index']
  #allocation1 [shape = 'u32[144,128]{1,0:T(1,128)}', space=vmem, size = 0x12000, scoped, tag = 'internal scratch']
  %s0 = inlined_call_operand.hbm [shape: f32[5], index: 0, kind: input, shape index: {}]
  %s1 = inlined_call_operand.hbm [shape: f32[2,3,2,128], index: 1, kind: input, shape index: {}]
  %s2 = inlined_call_operand.hbm [shape: f32[2,3,2,128], index: 2, kind: output, shape index: {}]
  %s3 = sld [smem:[#allocation0]]
  $region49: #{tpu_custom_call.1} parent=0
    _
  %s5 = ssub.s32 1, %s3
  %s6 = scalar_select 0, %s5, %s3
  $region1: #{tpu_custom_call.1} parent=0
    #allocation2 [shape = 'u8[512]{0}', space=smem, size = 0x200, scoped, tag = 'input window, operand 0, single buffered']
    #allocation3 [shape = 's32[2]{0}', space=sflag, size = 0x8, scoped, tag = 'scoped memory for tpu_custom_call.1']
    #allocation4 [shape = 's32[2]{0}', space=sflag, size = 0x8, scoped, tag = 'scoped memory for tpu_custom_call.1']
    #allocation5 [shape = 's32[2]{0}', space=sflag, size = 0x8, scoped, tag = 'scoped memory for tpu_custom_call.1']
    #allocation6 [shape = 'u8[6144]{0}', space=vmem, size = 0x1800, scoped, tag = 'input window, operand 1']
    #allocation7 [shape = 'u8[6144]{0}', space=vmem, size = 0x1800, scoped, tag = 'output window, operand 0']
    %7 = vsyncpa [#allocation5], 0
    %8 = vsyncpa [#allocation3], 0
    %s9 = scalar_lea.sflag [#allocation3], 1
    %10 = vsyncpa %s9, 0
    %11 = vsyncpa [#allocation4], 0
    %s12 = scalar_lea.sflag [#allocation4], 1
    %13 = vsyncpa %s12, 0
    loop: start=0, step=1, limit=4
    $region2: #{tpu_custom_call.1} parent=1 // loop_pre_header
      _
    $region3: #{tpu_custom_call.1} parent=1 // loop_header
      %s15 = sphi 0, %s19
      %p16 = scmp.ge.s32.totalorder %s15, 4
      %s22 = sphi 0, %s34
      %s23 = sphi 0, %s30
      %s24 = sphi 0, %s22
      %s25 = sphi 0, %s23
      %s26 = sphi 0, %s24
      %s27 = sphi 0, %s25
      %s35 = sphi 0, %s35
      %s37 = sphi 0, %s35
      %s38 = sphi 0, %s37
      %s52 = sphi 0, %s38
      %s60 = sphi 0, %s62
      %s63 = sphi 0, %s60
      %s64 = sphi 0, %s63
      %s80 = sphi 0, %s64
      %s88 = sphi 0, %s90
      %s91 = sphi 0, %s88
      %s92 = sphi 0, %s91
      %s108 = sphi 0, %s92
    $region4: #{tpu_custom_call.1} parent=1 // loop_header_branch
      %18 = sbr.rel (%p16) target = $region8
    $region5: #{tpu_custom_call.1} parent=1 // loop_body
      %s20 = ssub.s32 %s15, 1
      %s21 = ssub.s32 %s15, 2
      %s28 = sadd.s32 1, %s23
      %p29 = scmp.ge.s32.totalorder %s28, 1
      %s30 = scalar_select %p29, 0, %s28
      %s31 = sadd.s32 1, %s22
      %s32 = scalar_select %p29, %s31, %s22
      %p33 = scmp.ge.s32.totalorder %s32, 2
      %s34 = scalar_select %p33, 0, %s32
      %s36 = sadd.s32 %s35, 1
      %p39 = scmp.eq.s32.totalorder %s15, 1
      %p40 = scmp.ne.s32.totalorder %s35, %s37
      %p41 = scmp.eq.s32.totalorder %s15, 0
      %p42 = por %p40, %p41
      %p43 = scmp.ne.s32.totalorder %s35, %s37
      %p44 = scmp.eq.s32.totalorder %s20, 1
      %p45 = por %p43, %p44
      %p46 = scmp.ne.s32.totalorder %s37, %s38
      %p47 = scmp.eq.s32.totalorder %s20, 0
      %p48 = por %p46, %p47
      %p49 = scmp.ne.s32.totalorder %s37, %s38
      %p50 = scmp.eq.s32.totalorder %s21, 1
      %p51 = por %p49, %p50
      %p53 = scmp.ne.s32.totalorder %s38, %s52
      %p54 = scmp.eq.s32.totalorder %s21, 0
      %p55 = por %p53, %p54
      %s56 = ssub.s32 %s22, %s34
      %s57 = ssub.s32 %s23, %s30
      %s58 = sor.u32 %s56, %s57
      %p59 = scmp.eq.s32.totalorder %s58, 0
      %s61 = sadd.s32 %s60, 1
      %s62 = scalar_select %p59, %s60, %s61
      %p65 = pneg %p59
      %p66 = scmp.eq.s32.totalorder %s15, 1
      %p67 = por %p65, %p66
      %p68 = scmp.ne.s32.totalorder %s60, %s63
      %p69 = scmp.eq.s32.totalorder %s15, 0
      %p70 = por %p68, %p69
      %p71 = scmp.ne.s32.totalorder %s60, %s63
      %p72 = scmp.eq.s32.totalorder %s20, 1
      %p73 = por %p71, %p72
      %p74 = scmp.ne.s32.totalorder %s63, %s64
      %p75 = scmp.eq.s32.totalorder %s20, 0
      %p76 = por %p74, %p75
      %p77 = scmp.ne.s32.totalorder %s63, %s64
      %p78 = scmp.eq.s32.totalorder %s21, 1
      %p79 = por %p77, %p78
      %p81 = scmp.ne.s32.totalorder %s64, %s80
      %p82 = scmp.eq.s32.totalorder %s21, 0
      %p83 = por %p81, %p82
      %s84 = ssub.s32 %s22, %s34
      %s85 = ssub.s32 %s23, %s30
      %s86 = sor.u32 %s84, %s85
      %p87 = scmp.eq.s32.totalorder %s86, 0
      %s89 = sadd.s32 %s88, 1
      %s90 = scalar_select %p87, %s88, %s89
      %p93 = pneg %p87
      %p94 = scmp.eq.s32.totalorder %s15, 1
      %p95 = por %p93, %p94
      %p96 = scmp.ne.s32.totalorder %s88, %s91
      %p97 = scmp.eq.s32.totalorder %s15, 0
      %p98 = por %p96, %p97
      %p99 = scmp.ne.s32.totalorder %s88, %s91
      %p100 = scmp.eq.s32.totalorder %s20, 1
      %p101 = por %p99, %p100
      %p102 = scmp.ne.s32.totalorder %s91, %s92
      %p103 = scmp.eq.s32.totalorder %s20, 0
      %p104 = por %p102, %p103
      %p105 = scmp.ne.s32.totalorder %s91, %s92
      %p106 = scmp.eq.s32.totalorder %s21, 1
      %p107 = por %p105, %p106
      %p109 = scmp.ne.s32.totalorder %s92, %s108
      %p110 = scmp.eq.s32.totalorder %s21, 0
      %p111 = por %p109, %p110
      %p112 = scmp.le.s32.totalorder 1, %s15
      %p113 = scmp.lt.s32.totalorder %s15, 3
      %p114 = pnand %p112, %p113
      %p115 = pneg %p114
      // Predicated region
      $region9: #{tpu_custom_call.1} parent=5 // pred_check
        _
      $region10: #{tpu_custom_call.1} parent=5 // pred_check_branch
        %117 = sbr.rel (%p114) target = $region12
      $region11: #{tpu_custom_call.1} parent=5 // pred_region
        %s118 = ssub.s32 %s15, 1
        // Predicated region
        $region13: #{tpu_custom_call.1} parent=11 // pred_check
          %p119 = pneg %p48
        $region14: #{tpu_custom_call.1} parent=11 // pred_check_branch
          %121 = sbr.rel (%p119) target = $region16
        $region15: #{tpu_custom_call.1} parent=11 // pred_region
          %s123 = ssub.s32 16, 16
          %124 = vsyncadd [#allocation5], %s123
          %127 = dma.hbm_to_smem %s0, 16, [#allocation2], [#allocation5]
        $region16: #{tpu_custom_call.1} parent=11 // pred_fallthru
          _
      $region12: #{tpu_custom_call.1} parent=5 // pred_fallthru
        _
      %p128 = scmp.lt.s32.totalorder %s15, 2
      // Predicated region
      $region17: #{tpu_custom_call.1} parent=5 // pred_check
        %p129 = pneg %p128
      $region18: #{tpu_custom_call.1} parent=5 // pred_check_branch
        %131 = sbr.rel (%p129) target = $region20
      $region19: #{tpu_custom_call.1} parent=5 // pred_region
        // Predicated region
        $region21: #{tpu_custom_call.1} parent=19 // pred_check
          %p132 = pneg %p70
        $region22: #{tpu_custom_call.1} parent=19 // pred_check_branch
          %134 = sbr.rel (%p132) target = $region24
        $region23: #{tpu_custom_call.1} parent=19 // pred_region
          %s135 = sand.u32 %s60, 1
          %s136 = scalar_lea.sflag [#allocation3], %s135
          %s137 = sand.u32 %s60, 1
          %s138 = smul.addr %s137, 6
          %s139 = scalar_lea.vmem [#allocation6], %s138
          %s141 = ssub.s32 96, 96
          %142 = vsyncadd %s136, %s141
          %s143 = smul.addr %s22, 3
          %s144 = sadd.s32 %s23, %s143
          %s145 = smul.addr %s144, 32
          %s146 = scalar_lea.hbm %s1, %s145
          %s147 = sshll.u32 %s139, 4
          %s148 = int_to_ptr.vmem [resolvable:$true] %s147
          %153 = dma.hbm_to_vmem [thread:$0]  %s146, 96, %s148, %s136, 32, 32, 2
        $region24: #{tpu_custom_call.1} parent=19 // pred_fallthru
          _
      $region20: #{tpu_custom_call.1} parent=5 // pred_fallthru
        _
      %p154 = scmp.le.s32.totalorder 1, %s15
      %p155 = scmp.lt.s32.totalorder %s15, 3
      %p156 = pnand %p154, %p155
      %p157 = pneg %p156
      // Predicated region
      $region25: #{tpu_custom_call.1} parent=5 // pred_check
        _
      $region26: #{tpu_custom_call.1} parent=5 // pred_check_branch
        %159 = sbr.rel (%p156) target = $region28
      $region27: #{tpu_custom_call.1} parent=5 // pred_region
        %s160 = ssub.s32 %s15, 1
        // Predicated region
        $region29: #{tpu_custom_call.1} parent=27 // pred_check
          %p161 = pneg %p48
        $region30: #{tpu_custom_call.1} parent=27 // pred_check_branch
          %163 = sbr.rel (%p161) target = $region32
        $region31: #{tpu_custom_call.1} parent=27 // pred_region
          %164 = dma.done [#allocation5], 16
        $region32: #{tpu_custom_call.1} parent=27 // pred_fallthru
          _
        %s165 = sand.u32 %s63, 1
        %s166 = scalar_lea.sflag [#allocation3], %s165
        %s167 = sand.u32 %s63, 1
        %s168 = smul.addr %s167, 6
        %s169 = scalar_lea.vmem [#allocation6], %s168
        // Predicated region
        $region33: #{tpu_custom_call.1} parent=27 // pred_check
          %p170 = pneg %p76
        $region34: #{tpu_custom_call.1} parent=27 // pred_check_branch
          %172 = sbr.rel (%p170) target = $region36
        $region35: #{tpu_custom_call.1} parent=27 // pred_region
          %173 = dma.done %s166, 96
        $region36: #{tpu_custom_call.1} parent=27 // pred_fallthru
          _
        %174 = sfence
        %p175 = pneg %p48
        %p176 = pneg %p45
        %s177 = sand.u32 %s63, 1
        %s178 = scalar_lea.sflag [#allocation3], %s177
        %s179 = sand.u32 %s63, 1
        %s180 = smul.addr %s179, 6
        %s181 = scalar_lea.vmem [#allocation6], %s180
        %p182 = pneg %p76
        %p183 = pneg %p73
        %p184 = pneg %p104
        %p185 = pneg %p101
        %s186 = sand.u32 %s91, 1
        %s187 = scalar_lea.sflag [#allocation4], %s186
        %s188 = sand.u32 %s91, 1
        %s189 = smul.addr %s188, 6
        %s190 = scalar_lea.vmem [#allocation7], %s189
        %s191 = sld [smem:[#allocation2]]
        %s192 = sld [smem:[#allocation2 + $0x1]]
        %s193 = sld [smem:[#allocation2 + $0x2]]
        %s194 = sld [smem:[#allocation2 + $0x3]]
        %s195 = sld [smem:[#allocation2 + $0x4]]
        %v196 = vld [vmem:[%s169] sm:$0x3]
        %s197 = scalar_lea.vmem %s169, 2 [#allocation6]
        %v198 = vld [vmem:[%s197] sm:$0x3]
        %s199 = scalar_lea.vmem %s169, 4 [#allocation6]
        %v200 = vld [vmem:[%s199] sm:$0x3]
        %v201 = vstv %s191
        %v202 = vmul.f32 %v201, %v196
        %v203 = vstv %s192
        %v204 = vmul.f32 %v203, %v198
        %v205 = vadd.f32 %v202, %v204
        %v206 = vstv %s193
        %v207 = vmul.f32 %v206, %v200
        %v208 = vadd.f32 %v205, %v207
        %209 = vst [vmem:[%s190] sm:$0x3] %v208
        %v210 = vsub.f32 %v200, %v208
        %v211 = vstv %s194
        %v212 = vmul.f32 %v210, %v211
        %v213 = vadd.f32 %v212, 0.5
        %s214 = scalar_lea.vmem %s190, 2 [#allocation7]
        %215 = vst [vmem:[%s214] sm:$0x3] %v213
        %v216 = vsub.f32 %v196, %v208
        %v217 = vstv %s195
        %v218 = vmul.f32 %v216, %v217
        %v219 = vadd.f32 %v218, 0.5
        %s220 = scalar_lea.vmem %s190, 4 [#allocation7]
        %221 = vst [vmem:[%s220] sm:$0x3] %v219
        %s222 = sand.u32 %s91, 1
        %s223 = scalar_lea.sflag [#allocation4], %s222
        %s224 = sand.u32 %s91, 1
        %s225 = smul.addr %s224, 6
        %s226 = scalar_lea.vmem [#allocation7], %s225
        // Predicated region
        $region37: #{tpu_custom_call.1} parent=27 // pred_check
          %p227 = pneg %p101
        $region38: #{tpu_custom_call.1} parent=27 // pred_check_branch
          %229 = sbr.rel (%p227) target = $region40
        $region39: #{tpu_custom_call.1} parent=27 // pred_region
          %s231 = ssub.s32 96, 96
          %232 = vsyncadd %s223, %s231
          %s233 = smul.addr %s24, 3
          %s234 = sadd.s32 %s25, %s233
          %s235 = smul.addr %s234, 32
          %s236 = scalar_lea.hbm %s2, %s235
          %s237 = sshll.u32 %s226, 4
          %s238 = int_to_ptr.vmem [resolvable:$true] %s237
          %243 = dma.vmem_to_hbm [thread:$0]  %s238, 96, %s236, %s223, 32, 32, 2
        $region40: #{tpu_custom_call.1} parent=27 // pred_fallthru
          _
      $region28: #{tpu_custom_call.1} parent=5 // pred_fallthru
        _
      %p244 = scmp.le.s32.totalorder 2, %s15
      // Predicated region
      $region41: #{tpu_custom_call.1} parent=5 // pred_check
        %p245 = pneg %p244
      $region42: #{tpu_custom_call.1} parent=5 // pred_check_branch
        %247 = sbr.rel (%p245) target = $region44
      $region43: #{tpu_custom_call.1} parent=5 // pred_region
        %s248 = ssub.s32 %s15, 2
        // Predicated region
        $region45: #{tpu_custom_call.1} parent=43 // pred_check
          %p249 = pneg %p107
        $region46: #{tpu_custom_call.1} parent=43 // pred_check_branch
          %251 = sbr.rel (%p249) target = $region48
        $region47: #{tpu_custom_call.1} parent=43 // pred_region
          %s252 = sand.u32 %s92, 1
          %s253 = scalar_lea.sflag [#allocation4], %s252
          %s254 = sand.u32 %s92, 1
          %s255 = smul.addr %s254, 6
          %s256 = scalar_lea.vmem [#allocation7], %s255
          %257 = dma.done %s253, 96
        $region48: #{tpu_custom_call.1} parent=43 // pred_fallthru
          _
      $region44: #{tpu_custom_call.1} parent=5 // pred_fallthru
        _
    $region6: #{tpu_custom_call.1} parent=1 // loop_footer
      %s19 = sadd.s32 1, %s15
    $region7: #{tpu_custom_call.1} parent=1 // loop_footer_branch
      %14 = sbr.rel target = $region3
    $region8: #{tpu_custom_call.1} parent=1 // loop_exit
      _
    %258 = vsyncpa [#allocation3], 1
    %s259 = scalar_lea.sflag [#allocation3], 1
    %260 = vsyncpa %s259, 1
    %261 = vsyncpa [#allocation4], 1
    %s262 = scalar_lea.sflag [#allocation4], 1
    %263 = vsyncpa %s262, 1
    %264 = vsyncpa [#allocation5], 1
    %s265 = scalar_lea.sflag [#allocation5], 1
    %266 = vsyncpa %s265, 1

</llo_original>
